<compile_context>
chip_gen: v7x
topology: tpu7x:2x2x1
jax: 0.10.0
libtpu: 0.0.40
codegen_flags: <defaults>
</compile_context>

<pallas_src>
import jax
import jax.numpy as jnp
from jax.experimental import pallas as pl
from jax.experimental.pallas import tpu as pltpu


def _bottleneck_kernel(x_ref, w_ref, b_ref, o_ref):
    """One M-tile: out = x_tile @ W^T + b. Whole K and N per step."""
    x = x_ref[...]
    w = w_ref[...]
    if x.dtype != w.dtype:
        x = x.astype(w.dtype)  # feed the MXU bf16 when weights are bf16
    acc = jnp.dot(x, w, preferred_element_type=jnp.float32)
    o_ref[...] = (acc + b_ref[...].astype(jnp.float32)).astype(o_ref.dtype)


def _round_up(v: int, m: int) -> int:
    return -(-v // m) * m


def _chip_info():
    """Return (vmem_capacity_bytes, n_tensorcores) with conservative fallbacks."""
    vmem_cap = 64 * 2**20  # conservative default (v7x per-TC VMEM)
    ncores = 1
    try:
        info = pltpu.get_tpu_info()
        vmem_cap = int(getattr(info, "vmem_capacity_bytes", vmem_cap))
    except Exception:
        pass
    try:
        kind = jax.devices()[0].device_kind.lower()
        if "v7" in kind:
            ncores = 2                       # 2 TensorCores share the grid
            vmem_cap = min(vmem_cap, 64 * 2**20)
    except Exception:
        pass
    return vmem_cap, ncores


def _choose_tm(M, K, N, x_bytes, w_resident_bytes, out_bytes, vmem_budget, ncores):
    """Rows per tile.

    Single large block on 1-TC chips (v5e/v6e): splitting a mem-bound kernel is
    pure per-step overhead there.  On v7x (2 TCs) use >=2 blocks with an even
    grid so neither core idles on a tail step.  Always a multiple of 8 (or == M
    for a single block), capped by the VMEM budget and 1024 rows.
    """
    row_bytes = 2 * K * x_bytes + 2 * N * out_bytes   # double-buffered x + out per row
    avail = vmem_budget - w_resident_bytes - 2 * N * 4
    if avail >= 8 * row_bytes:
        tm_cap = min(1024, (avail // row_bytes // 8) * 8)
    else:
        tm_cap = 8  # weight nearly fills VMEM; see TODO about K tiling
    tm_cap = max(8, tm_cap)

    if ncores <= 1 or M < 16:
        return M if M <= tm_cap else tm_cap

    # v7x: aim for an even number of grid steps across the two TensorCores.
    tm = min(tm_cap, _round_up(-(-M // 2), 8))
    if (-(-M // tm)) % 2 == 1:
        for cand in range(tm - 8, 7, -8):
            if (-(-M // cand)) % 2 == 0:
                tm = cand
                break
    return tm


def bottleneck_forward(x, w_t, b, *, out_dtype=jnp.float32):
    """x: (M, K), w_t: (K, N) f32/bf16, b: (N,) -> (M, N) out_dtype."""
    M, K = x.shape
    K2, N = w_t.shape
    assert K == K2 and b.shape == (N,)

    vmem_cap, ncores = _chip_info()
    vmem_budget = int(0.75 * vmem_cap)       # ~48 MiB on v7x, ~96 MiB on v5e/v6e

    xb = jnp.dtype(x.dtype).itemsize
    wb = jnp.dtype(w_t.dtype).itemsize
    ob = jnp.dtype(out_dtype).itemsize
    w_resident = 2 * K * N * wb              # resident weight (2 bufs allocated)

    tm = _choose_tm(M, K, N, xb, w_resident, ob, vmem_budget, ncores)
    grid_m = pl.cdiv(M, tm)                  # ragged tail handled by Pallas masking

    b2d = b.reshape(1, N).astype(jnp.float32)

    vmem_need = (2 * tm * K * xb            # double-buffered activation tiles
                 + w_resident               # resident weight
                 + 2 * N * 4                # bias
                 + 2 * tm * N * ob          # double-buffered output tiles
                 + (1 << 20))               # slack
    vmem_limit = int(min(max(vmem_need, 16 * 2**20), vmem_cap))

    cost = pl.CostEstimate(
        flops=2 * M * K * N,
        transcendentals=0,
        bytes_accessed=M * K * xb + K * N * wb + N * 4 + M * N * ob,
    )

    return pl.pallas_call(
        _bottleneck_kernel,
        out_shape=jax.ShapeDtypeStruct((M, N), out_dtype),
        grid_spec=pltpu.PrefetchScalarGridSpec(
            num_scalar_prefetch=0,
            grid=(grid_m,),
            in_specs=[
                pl.BlockSpec((tm, K), lambda i: (i, 0)),  # activations, streamed over M
                pl.BlockSpec((K, N), lambda i: (0, 0)),   # whole weight, VMEM-resident
                pl.BlockSpec((1, N), lambda i: (0, 0)),   # bias, fetched once
            ],
            out_specs=pl.BlockSpec((tm, N), lambda i: (i, 0)),  # full-N lane-dense
        ),
        compiler_params=pltpu.CompilerParams(
            dimension_semantics=("parallel",),
            vmem_limit_bytes=vmem_limit,
        ),
        cost_estimate=cost,
    )(x, w_t, b2d)


class BottleneckPallas:
    """JAX/Pallas counterpart of the PyTorch Bottleneck module."""

    def __init__(self, feature_dim=2048, bottleneck_dim=256, *, key=None,
                 param_dtype=jnp.bfloat16):
        if key is None:
            key = jax.random.PRNGKey(0)
        # PyTorch: weight.data.normal_(0, 0.005); bias.data.fill_(0.1)
        w = 0.005 * jax.random.normal(
            key, (bottleneck_dim, feature_dim), dtype=jnp.float32
        )
        self.bottleneck_dim = bottleneck_dim
        # Store W^T; bf16 halves the weight HBM traffic (kernel is mem-bound).
        w_t = jnp.asarray(w.T, dtype=param_dtype)      # (feature_dim, bottleneck_dim)
        bias = jnp.full((bottleneck_dim,), 0.1, jnp.float32)
        # Lane-dense guard: keep the stored output dim a multiple of 128 so the
        # store path uses unmasked vst (no-op for the default bottleneck_dim=256).
        n_pad = _round_up(bottleneck_dim, 128)
        if n_pad != bottleneck_dim:
            w_t = jnp.pad(w_t, ((0, 0), (0, n_pad - bottleneck_dim)))
            bias = jnp.pad(bias, (0, n_pad - bottleneck_dim))
        self.w_t = w_t
        self.b = bias

    def __call__(self, x):
        out = bottleneck_forward(x, self.w_t, self.b)
        if out.shape[1] != self.bottleneck_dim:
            out = out[:, : self.bottleneck_dim]
        return out


if __name__ == "__main__":
    # Small shapes consistent with the module: batch=8, feature_dim=512, bottleneck_dim=256
    batch, feature_dim, bottleneck_dim = 8, 512, 256

    key = jax.random.PRNGKey(0)
    kx, kw = jax.random.split(key)
    x = jax.random.normal(kx, (batch, feature_dim), dtype=jnp.float32)

    module = BottleneckPallas(feature_dim, bottleneck_dim, key=kw)
    out = jax.block_until_ready(module(x))

    # Reference in f32 using the (bf16-quantized) stored weights; remaining delta
    # comes only from the in-kernel bf16 activation cast / MXU rounding.
    ref = x @ module.w_t.astype(jnp.float32)[:, :bottleneck_dim] + module.b[:bottleneck_dim]
    assert out.shape == (batch, bottleneck_dim)
    assert jnp.allclose(out, ref, atol=3e-3, rtol=3e-2), "mismatch vs reference"

    print("KERNEL_OK")
</pallas_src>

<mosaic_0001>
module attributes {stable_mosaic.version = 11 : i64} {
  func.func @_bottleneck_kernel(%arg0: i32, %arg1: memref<8x512xf32, #tpu.memory_space<vmem>>, %arg2: memref<512x256xbf16, #tpu.memory_space<vmem>>, %arg3: memref<1x256xf32, #tpu.memory_space<vmem>>, %arg4: memref<8x256xf32, #tpu.memory_space<vmem>>) attributes {dimension_semantics = [#tpu.dimension_semantics<parallel>], iteration_bounds = array<i64: 1>, scalar_prefetch = 0 : i64, scratch_operands = 0 : i64, tpu.core_type = #tpu.core_type<tc>, window_params = [{transform_indices = @transform_0, window_bounds = array<i64: 8, 512>}, {pipeline_mode = #tpu.pipeline_mode<synchronous>, transform_indices = @transform_1, window_bounds = array<i64: 512, 256>}, {pipeline_mode = #tpu.pipeline_mode<synchronous>, transform_indices = @transform_2, window_bounds = array<i64: 1, 256>}, {transform_indices = @transform_3, window_bounds = array<i64: 8, 256>}]} {
    %c0 = arith.constant 0 : index
    %c0_0 = arith.constant 0 : index
    %0 = vector.load %arg1[%c0, %c0_0] : memref<8x512xf32, #tpu.memory_space<vmem>>, vector<8x512xf32>
    %c0_1 = arith.constant 0 : index
    %c0_2 = arith.constant 0 : index
    %1 = vector.load %arg2[%c0_1, %c0_2] : memref<512x256xbf16, #tpu.memory_space<vmem>>, vector<512x256xbf16>
    %2 = arith.truncf %0 : vector<8x512xf32> to vector<8x512xbf16>
    %cst = arith.constant dense<0.000000e+00> : vector<8x256xf32>
    %3 = tpu.matmul %2, %1, %cst {dimension_numbers = #tpu.dot_dimension_numbers<[1], [0], [0], [1], [0, 0, 1, 1], [], []>} : vector<8x512xbf16>, vector<512x256xbf16>, vector<8x256xf32> -> vector<8x256xf32>
    %c0_3 = arith.constant 0 : index
    %c0_4 = arith.constant 0 : index
    %4 = vector.load %arg3[%c0_3, %c0_4] : memref<1x256xf32, #tpu.memory_space<vmem>>, vector<1x256xf32>
    %5 = vector.broadcast %4 : vector<1x256xf32> to vector<8x256xf32>
    %6 = arith.addf %3, %5 : vector<8x256xf32>
    %c0_5 = arith.constant 0 : index
    %c0_6 = arith.constant 0 : index
    %7 = vector.load %arg4[%c0_5, %c0_6] : memref<8x256xf32, #tpu.memory_space<vmem>>, vector<8x256xf32>
    tpu.vector_store %arg4[%c0_5, %c0_6], %6 {strides = array<i32>} : memref<8x256xf32, #tpu.memory_space<vmem>>, vector<8x256xf32>,
    return
  }
  func.func @transform_0(%arg0: i32) -> (i32, i32) {
    %c0_i32 = arith.constant 0 : i32
    %c0_i32_0 = arith.constant 0 : i32
    return %arg0, %c0_i32 : i32, i32
  }
  func.func @transform_1(%arg0: i32) -> (i32, i32) {
    %c0_i32 = arith.constant 0 : i32
    %c0_i32_0 = arith.constant 0 : i32
    %c0_i32_1 = arith.constant 0 : i32
    return %c0_i32, %c0_i32_0 : i32, i32
  }
  func.func @transform_2(%arg0: i32) -> (i32, i32) {
    %c0_i32 = arith.constant 0 : i32
    %c0_i32_0 = arith.constant 0 : i32
    %c0_i32_1 = arith.constant 0 : i32
    return %c0_i32, %c0_i32_0 : i32, i32
  }
  func.func @transform_3(%arg0: i32) -> (i32, i32) {
    %c0_i32 = arith.constant 0 : i32
    %c0_i32_0 = arith.constant 0 : i32
    return %arg0, %c0_i32 : i32, i32
  }
}

</mosaic_0001>

<llo_original>
// kernel: tpu_custom_call.1
$region0: #{tpu_custom_call.1}
  #allocation0 [shape = 'u32[]', space=smem, size = 0x4, offset = 0x4, fixed_abs, tag = 'smem constant byte address 0x4 - core index']
  #allocation1 [shape = 'u32[144,128]{1,0:T(1,128)}', space=vmem, size = 0x12000, scoped, tag = 'internal scratch']
  %s0 = inlined_call_operand.hbm [shape: f32[8,512], index: 0, kind: input, shape index: {}]
  %s1 = inlined_call_operand.hbm [shape: bf16[512,256], index: 1, kind: input, shape index: {}]
  %s2 = inlined_call_operand.vmem [shape: f32[1,256], index: 2, kind: input, shape index: {}]
  %s3 = inlined_call_operand.hbm [shape: f32[8,256], index: 3, kind: output, shape index: {}]
  %s4 = sld [smem:[#allocation0]]
  $region30: #{tpu_custom_call.1} parent=0
    _
  %s6 = ssub.s32 1, %s4
  %s7 = scalar_select 0, %s6, %s4
  $region1: #{tpu_custom_call.1} parent=0
    #allocation2 [shape = 'u8[16384]{0}', space=vmem, size = 0x4000, scoped, tag = 'input window, operand 0, single buffered']
    #allocation3 [shape = 's32[1]{0}', space=sflag, size = 0x4, scoped, tag = 'scoped memory for tpu_custom_call.1']
    #allocation4 [shape = 's32[1]{0}', space=sflag, size = 0x4, scoped, tag = 'scoped memory for tpu_custom_call.1']
    #allocation5 [shape = 'u8[262144]{0}', space=vmem, size = 0x40000, scoped, tag = 'input window, operand 1, single buffered']
    #allocation6 [shape = 's32[1]{0}', space=sflag, size = 0x4, scoped, tag = 'scoped memory for tpu_custom_call.1']
    #allocation7 [shape = 'u8[8192]{0}', space=vmem, size = 0x2000, scoped, tag = 'output window, operand 0, single buffered']
    %8 = vsyncpa [#allocation3], 0
    %9 = vsyncpa [#allocation6], 0
    %10 = vsyncpa [#allocation4], 0
    // Predicated region
    $region2: #{tpu_custom_call.1} parent=1 // pred_check
      _
    $region3: #{tpu_custom_call.1} parent=1 // pred_check_branch
      %12 = sbr.rel (0) target = $region5
    $region4: #{tpu_custom_call.1} parent=1 // pred_region
      %s14 = ssub.s32 512, 512
      %15 = vsyncadd [#allocation3], %s14
      %s17 = sshll.u32 [#allocation2], 4
      %s18 = int_to_ptr.vmem [resolvable:$true] %s17
      %20 = dma.hbm_to_vmem [thread:$0]  %s0, 512, %s18, [#allocation3]
    $region5: #{tpu_custom_call.1} parent=1 // pred_fallthru
      _
    // Predicated region
    $region6: #{tpu_custom_call.1} parent=1 // pred_check
      _
    $region7: #{tpu_custom_call.1} parent=1 // pred_check_branch
      %22 = sbr.rel (0) target = $region9
    $region8: #{tpu_custom_call.1} parent=1 // pred_region
      %s24 = ssub.s32 8192, 8192
      %25 = vsyncadd [#allocation6], %s24
      %s26 = sshll.u32 [#allocation5], 4
      %s27 = int_to_ptr.vmem [resolvable:$true] %s26
      %32 = dma.hbm_to_vmem [thread:$0]  %s1, 8192, %s27, [#allocation6], 128, 128, 8
    $region9: #{tpu_custom_call.1} parent=1 // pred_fallthru
      _
    // Predicated region
    $region10: #{tpu_custom_call.1} parent=1 // pred_check
      _
    $region11: #{tpu_custom_call.1} parent=1 // pred_check_branch
      %34 = sbr.rel (0) target = $region13
    $region12: #{tpu_custom_call.1} parent=1 // pred_region
      _
    $region13: #{tpu_custom_call.1} parent=1 // pred_fallthru
      _
    // Predicated region
    $region14: #{tpu_custom_call.1} parent=1 // pred_check
      _
    $region15: #{tpu_custom_call.1} parent=1 // pred_check_branch
      %36 = sbr.rel (0) target = $region17
    $region16: #{tpu_custom_call.1} parent=1 // pred_region
      %37 = dma.done [#allocation3], 512
    $region17: #{tpu_custom_call.1} parent=1 // pred_fallthru
      _
    // Predicated region
    $region18: #{tpu_custom_call.1} parent=1 // pred_check
      _
    $region19: #{tpu_custom_call.1} parent=1 // pred_check_branch
      %39 = sbr.rel (0) target = $region21
    $region20: #{tpu_custom_call.1} parent=1 // pred_region
      %40 = dma.done [#allocation6], 8192
    $region21: #{tpu_custom_call.1} parent=1 // pred_fallthru
      _
    %v41 = vld [vmem:[#allocation2] sm:$0xff]
    %v42 = vld [vmem:[#allocation2 + $0x8] sm:$0xff]
    %v43 = vld [vmem:[#allocation2 + $0x10] sm:$0xff]
    %v44 = vld [vmem:[#allocation2 + $0x18] sm:$0xff]
    %v45 = vld [vmem:[#allocation5] sm:$0xff]
    %v46 = vld [vmem:[#allocation5 + $0x8] sm:$0xff]
    %v47 = vld [vmem:[#allocation5 + $0x10] sm:$0xff]
    %v48 = vld [vmem:[#allocation5 + $0x18] sm:$0xff]
    %v49 = vld [vmem:[#allocation5 + $0x20] sm:$0xff]
    %v50 = vld [vmem:[#allocation5 + $0x28] sm:$0xff]
    %v51 = vld [vmem:[#allocation5 + $0x30] sm:$0xff]
    %v52 = vld [vmem:[#allocation5 + $0x38] sm:$0xff]
    %v53 = vld [vmem:[#allocation5 + $0x40] sm:$0xff]
    %v54 = vld [vmem:[#allocation5 + $0x48] sm:$0xff]
    %v55 = vld [vmem:[#allocation5 + $0x50] sm:$0xff]
    %v56 = vld [vmem:[#allocation5 + $0x58] sm:$0xff]
    %v57 = vld [vmem:[#allocation5 + $0x60] sm:$0xff]
    %v58 = vld [vmem:[#allocation5 + $0x68] sm:$0xff]
    %v59 = vld [vmem:[#allocation5 + $0x70] sm:$0xff]
    %v60 = vld [vmem:[#allocation5 + $0x78] sm:$0xff]
    %v61 = vld [vmem:[#allocation5 + $0x80] sm:$0xff]
    %v62 = vld [vmem:[#allocation5 + $0x88] sm:$0xff]
    %v63 = vld [vmem:[#allocation5 + $0x90] sm:$0xff]
    %v64 = vld [vmem:[#allocation5 + $0x98] sm:$0xff]
    %v65 = vld [vmem:[#allocation5 + $0xa0] sm:$0xff]
    %v66 = vld [vmem:[#allocation5 + $0xa8] sm:$0xff]
    %v67 = vld [vmem:[#allocation5 + $0xb0] sm:$0xff]
    %v68 = vld [vmem:[#allocation5 + $0xb8] sm:$0xff]
    %v69 = vld [vmem:[#allocation5 + $0xc0] sm:$0xff]
    %v70 = vld [vmem:[#allocation5 + $0xc8] sm:$0xff]
    %v71 = vld [vmem:[#allocation5 + $0xd0] sm:$0xff]
    %v72 = vld [vmem:[#allocation5 + $0xd8] sm:$0xff]
    %v73 = vld [vmem:[#allocation5 + $0xe0] sm:$0xff]
    %v74 = vld [vmem:[#allocation5 + $0xe8] sm:$0xff]
    %v75 = vld [vmem:[#allocation5 + $0xf0] sm:$0xff]
    %v76 = vld [vmem:[#allocation5 + $0xf8] sm:$0xff]
    %v77 = vld [vmem:[#allocation5 + $0x100] sm:$0xff]
    %v78 = vld [vmem:[#allocation5 + $0x108] sm:$0xff]
    %v79 = vld [vmem:[#allocation5 + $0x110] sm:$0xff]
    %v80 = vld [vmem:[#allocation5 + $0x118] sm:$0xff]
    %v81 = vld [vmem:[#allocation5 + $0x120] sm:$0xff]
    %v82 = vld [vmem:[#allocation5 + $0x128] sm:$0xff]
    %v83 = vld [vmem:[#allocation5 + $0x130] sm:$0xff]
    %v84 = vld [vmem:[#allocation5 + $0x138] sm:$0xff]
    %v85 = vld [vmem:[#allocation5 + $0x140] sm:$0xff]
    %v86 = vld [vmem:[#allocation5 + $0x148] sm:$0xff]
    %v87 = vld [vmem:[#allocation5 + $0x150] sm:$0xff]
    %v88 = vld [vmem:[#allocation5 + $0x158] sm:$0xff]
    %v89 = vld [vmem:[#allocation5 + $0x160] sm:$0xff]
    %v90 = vld [vmem:[#allocation5 + $0x168] sm:$0xff]
    %v91 = vld [vmem:[#allocation5 + $0x170] sm:$0xff]
    %v92 = vld [vmem:[#allocation5 + $0x178] sm:$0xff]
    %v93 = vld [vmem:[#allocation5 + $0x180] sm:$0xff]
    %v94 = vld [vmem:[#allocation5 + $0x188] sm:$0xff]
    %v95 = vld [vmem:[#allocation5 + $0x190] sm:$0xff]
    %v96 = vld [vmem:[#allocation5 + $0x198] sm:$0xff]
    %v97 = vld [vmem:[#allocation5 + $0x1a0] sm:$0xff]
    %v98 = vld [vmem:[#allocation5 + $0x1a8] sm:$0xff]
    %v99 = vld [vmem:[#allocation5 + $0x1b0] sm:$0xff]
    %v100 = vld [vmem:[#allocation5 + $0x1b8] sm:$0xff]
    %v101 = vld [vmem:[#allocation5 + $0x1c0] sm:$0xff]
    %v102 = vld [vmem:[#allocation5 + $0x1c8] sm:$0xff]
    %v103 = vld [vmem:[#allocation5 + $0x1d0] sm:$0xff]
    %v104 = vld [vmem:[#allocation5 + $0x1d8] sm:$0xff]
    %v105 = vld [vmem:[#allocation5 + $0x1e0] sm:$0xff]
    %v106 = vld [vmem:[#allocation5 + $0x1e8] sm:$0xff]
    %v107 = vld [vmem:[#allocation5 + $0x1f0] sm:$0xff]
    %v108 = vld [vmem:[#allocation5 + $0x1f8] sm:$0xff]
    %v109 = vpack.c.bf16 %v41, %v41
    %v110 = vpack.c.bf16 %v42, %v42
    %v111 = vpack.c.bf16 %v43, %v43
    %v112 = vpack.c.bf16 %v44, %v44
    %v113 = vld [vmem:[%s2] sm:$0x3]
    %v115 = vlaneseq
    %v116 = vshrl.u32 %v115, 7
    %v117 = vsub.s32 0, %v116
    %v118 = vrot.slane %v113, %v117
    %v119 = vlaneseq
    %v120 = vshrl.u32 %v119, 7
    %v121 = vsub.s32 1, %v120
    %v122 = vrot.slane %v113, %v121
    %v189 = vunpack.c.l.b16 %v45
    %v190 = vunpack.c.h.b16 %v45
    %v191 = vunpack.c.l.b16 %v46
    %v192 = vunpack.c.h.b16 %v46
    %v193 = vunpack.c.l.b16 %v47
    %v194 = vunpack.c.h.b16 %v47
    %v195 = vunpack.c.l.b16 %v48
    %v196 = vunpack.c.h.b16 %v48
    %v197 = vunpack.c.l.b16 %v49
    %v198 = vunpack.c.h.b16 %v49
    %v199 = vunpack.c.l.b16 %v50
    %v200 = vunpack.c.h.b16 %v50
    %v201 = vunpack.c.l.b16 %v51
    %v202 = vunpack.c.h.b16 %v51
    %v203 = vunpack.c.l.b16 %v52
    %v204 = vunpack.c.h.b16 %v52
    %v205 = vunpack.c.l.b16 %v53
    %v206 = vunpack.c.h.b16 %v53
    %v207 = vunpack.c.l.b16 %v54
    %v208 = vunpack.c.h.b16 %v54
    %v209 = vunpack.c.l.b16 %v55
    %v210 = vunpack.c.h.b16 %v55
    %v211 = vunpack.c.l.b16 %v56
    %v212 = vunpack.c.h.b16 %v56
    %v213 = vunpack.c.l.b16 %v57
    %v214 = vunpack.c.h.b16 %v57
    %v215 = vunpack.c.l.b16 %v58
    %v216 = vunpack.c.h.b16 %v58
    %v217 = vunpack.c.l.b16 %v59
    %v218 = vunpack.c.h.b16 %v59
    %v219 = vunpack.c.l.b16 %v60
    %v220 = vunpack.c.h.b16 %v60
    %v221 = vunpack.c.l.b16 %v61
    %v222 = vunpack.c.h.b16 %v61
    %v223 = vunpack.c.l.b16 %v62
    %v224 = vunpack.c.h.b16 %v62
    %v225 = vunpack.c.l.b16 %v63
    %v226 = vunpack.c.h.b16 %v63
    %v227 = vunpack.c.l.b16 %v64
    %v228 = vunpack.c.h.b16 %v64
    %v229 = vunpack.c.l.b16 %v65
    %v230 = vunpack.c.h.b16 %v65
    %v231 = vunpack.c.l.b16 %v66
    %v232 = vunpack.c.h.b16 %v66
    %v233 = vunpack.c.l.b16 %v67
    %v234 = vunpack.c.h.b16 %v67
    %v235 = vunpack.c.l.b16 %v68
    %v236 = vunpack.c.h.b16 %v68
    %v237 = vunpack.c.l.b16 %v69
    %v238 = vunpack.c.h.b16 %v69
    %v239 = vunpack.c.l.b16 %v70
    %v240 = vunpack.c.h.b16 %v70
    %v241 = vunpack.c.l.b16 %v71
    %v242 = vunpack.c.h.b16 %v71
    %v243 = vunpack.c.l.b16 %v72
    %v244 = vunpack.c.h.b16 %v72
    %v245 = vunpack.c.l.b16 %v73
    %v246 = vunpack.c.h.b16 %v73
    %v247 = vunpack.c.l.b16 %v74
    %v248 = vunpack.c.h.b16 %v74
    %v249 = vunpack.c.l.b16 %v75
    %v250 = vunpack.c.h.b16 %v75
    %v251 = vunpack.c.l.b16 %v76
    %v252 = vunpack.c.h.b16 %v76
    %v253 = vunpack.c.l.b16 %v77
    %v254 = vunpack.c.h.b16 %v77
    %v255 = vunpack.c.l.b16 %v78
    %v256 = vunpack.c.h.b16 %v78
    %v257 = vunpack.c.l.b16 %v79
    %v258 = vunpack.c.h.b16 %v79
    %v259 = vunpack.c.l.b16 %v80
    %v260 = vunpack.c.h.b16 %v80
    %v261 = vunpack.c.l.b16 %v81
    %v262 = vunpack.c.h.b16 %v81
    %v263 = vunpack.c.l.b16 %v82
    %v264 = vunpack.c.h.b16 %v82
    %v265 = vunpack.c.l.b16 %v83
    %v266 = vunpack.c.h.b16 %v83
    %v267 = vunpack.c.l.b16 %v84
    %v268 = vunpack.c.h.b16 %v84
    %v269 = vunpack.c.l.b16 %v85
    %v270 = vunpack.c.h.b16 %v85
    %v271 = vunpack.c.l.b16 %v86
    %v272 = vunpack.c.h.b16 %v86
    %v273 = vunpack.c.l.b16 %v87
    %v274 = vunpack.c.h.b16 %v87
    %v275 = vunpack.c.l.b16 %v88
    %v276 = vunpack.c.h.b16 %v88
    %v277 = vunpack.c.l.b16 %v89
    %v278 = vunpack.c.h.b16 %v89
    %v279 = vunpack.c.l.b16 %v90
    %v280 = vunpack.c.h.b16 %v90
    %v281 = vunpack.c.l.b16 %v91
    %v282 = vunpack.c.h.b16 %v91
    %v283 = vunpack.c.l.b16 %v92
    %v284 = vunpack.c.h.b16 %v92
    %v285 = vunpack.c.l.b16 %v93
    %v286 = vunpack.c.h.b16 %v93
    %v287 = vunpack.c.l.b16 %v94
    %v288 = vunpack.c.h.b16 %v94
    %v289 = vunpack.c.l.b16 %v95
    %v290 = vunpack.c.h.b16 %v95
    %v291 = vunpack.c.l.b16 %v96
    %v292 = vunpack.c.h.b16 %v96
    %v293 = vunpack.c.l.b16 %v97
    %v294 = vunpack.c.h.b16 %v97
    %v295 = vunpack.c.l.b16 %v98
    %v296 = vunpack.c.h.b16 %v98
    %v297 = vunpack.c.l.b16 %v99
    %v298 = vunpack.c.h.b16 %v99
    %v299 = vunpack.c.l.b16 %v100
    %v300 = vunpack.c.h.b16 %v100
    %v301 = vunpack.c.l.b16 %v101
    %v302 = vunpack.c.h.b16 %v101
    %v303 = vunpack.c.l.b16 %v102
    %v304 = vunpack.c.h.b16 %v102
    %v305 = vunpack.c.l.b16 %v103
    %v306 = vunpack.c.h.b16 %v103
    %v307 = vunpack.c.l.b16 %v104
    %v308 = vunpack.c.h.b16 %v104
    %v309 = vunpack.c.l.b16 %v105
    %v310 = vunpack.c.h.b16 %v105
    %v311 = vunpack.c.l.b16 %v106
    %v312 = vunpack.c.h.b16 %v106
    %v313 = vunpack.c.l.b16 %v107
    %v314 = vunpack.c.h.b16 %v107
    %v315 = vunpack.c.l.b16 %v108
    %v316 = vunpack.c.h.b16 %v108
    %v317 = vpack.c.b16 %v191, %v189
    %v318 = vpack.c.b16 %v192, %v190
    %v319 = vpack.c.b16 %v195, %v193
    %v320 = vpack.c.b16 %v196, %v194
    %v321 = vpack.c.b16 %v199, %v197
    %v322 = vpack.c.b16 %v200, %v198
    %v323 = vpack.c.b16 %v203, %v201
    %v324 = vpack.c.b16 %v204, %v202
    %v325 = vpack.c.b16 %v207, %v205
    %v326 = vpack.c.b16 %v208, %v206
    %v327 = vpack.c.b16 %v211, %v209
    %v328 = vpack.c.b16 %v212, %v210
    %v329 = vpack.c.b16 %v215, %v213
    %v330 = vpack.c.b16 %v216, %v214
    %v331 = vpack.c.b16 %v219, %v217
    %v332 = vpack.c.b16 %v220, %v218
    %v333 = vpack.c.b16 %v223, %v221
    %v334 = vpack.c.b16 %v224, %v222
    %v335 = vpack.c.b16 %v227, %v225
    %v336 = vpack.c.b16 %v228, %v226
    %v337 = vpack.c.b16 %v231, %v229
    %v338 = vpack.c.b16 %v232, %v230
    %v339 = vpack.c.b16 %v235, %v233
    %v340 = vpack.c.b16 %v236, %v234
    %v341 = vpack.c.b16 %v239, %v237
    %v342 = vpack.c.b16 %v240, %v238
    %v343 = vpack.c.b16 %v243, %v241
    %v344 = vpack.c.b16 %v244, %v242
    %v345 = vpack.c.b16 %v247, %v245
    %v346 = vpack.c.b16 %v248, %v246
    %v347 = vpack.c.b16 %v251, %v249
    %v348 = vpack.c.b16 %v252, %v250
    %v349 = vpack.c.b16 %v255, %v253
    %v350 = vpack.c.b16 %v256, %v254
    %v351 = vpack.c.b16 %v259, %v257
    %v352 = vpack.c.b16 %v260, %v258
    %v353 = vpack.c.b16 %v263, %v261
    %v354 = vpack.c.b16 %v264, %v262
    %v355 = vpack.c.b16 %v267, %v265
    %v356 = vpack.c.b16 %v268, %v266
    %v357 = vpack.c.b16 %v271, %v269
    %v358 = vpack.c.b16 %v272, %v270
    %v359 = vpack.c.b16 %v275, %v273
    %v360 = vpack.c.b16 %v276, %v274
    %v361 = vpack.c.b16 %v279, %v277
    %v362 = vpack.c.b16 %v280, %v278
    %v363 = vpack.c.b16 %v283, %v281
    %v364 = vpack.c.b16 %v284, %v282
    %v365 = vpack.c.b16 %v287, %v285
    %v366 = vpack.c.b16 %v288, %v286
    %v367 = vpack.c.b16 %v291, %v289
    %v368 = vpack.c.b16 %v292, %v290
    %v369 = vpack.c.b16 %v295, %v293
    %v370 = vpack.c.b16 %v296, %v294
    %v371 = vpack.c.b16 %v299, %v297
    %v372 = vpack.c.b16 %v300, %v298
    %v373 = vpack.c.b16 %v303, %v301
    %v374 = vpack.c.b16 %v304, %v302
    %v375 = vpack.c.b16 %v307, %v305
    %v376 = vpack.c.b16 %v308, %v306
    %v377 = vpack.c.b16 %v311, %v309
    %v378 = vpack.c.b16 %v312, %v310
    %v379 = vpack.c.b16 %v315, %v313
    %v380 = vpack.c.b16 %v316, %v314
    %445 = vmatprep.subr.bf16.mxu0 %v318
    %446 = vmatpush1.bf16.msra.mxu0 %v317
    %447 = vmatprep.subr.bf16.mxu0 %v320
    %448 = vmatpush1.bf16.msra.mxu0 %v319
    %449 = vmatprep.subr.bf16.mxu0 %v322
    %450 = vmatpush1.bf16.msra.mxu0 %v321
    %451 = vmatprep.subr.bf16.mxu0 %v324
    %452 = vmatpush1.bf16.msra.mxu0 %v323
    %453 = vmatprep.subr.bf16.mxu0 %v326
    %454 = vmatpush1.bf16.msra.mxu0 %v325
    %455 = vmatprep.subr.bf16.mxu0 %v328
    %456 = vmatpush1.bf16.msra.mxu0 %v327
    %457 = vmatprep.subr.bf16.mxu0 %v330
    %458 = vmatpush1.bf16.msra.mxu0 %v329
    %459 = vmatprep.subr.bf16.mxu0 %v332
    %460 = vmatpush1.bf16.msra.mxu0 %v331
    %461 = vmatprep.subr.bf16.mxu0 %v334
    %462 = vmatpush1.bf16.msra.mxu0 %v333
    %463 = vmatprep.subr.bf16.mxu0 %v336
    %464 = vmatpush1.bf16.msra.mxu0 %v335
    %465 = vmatprep.subr.bf16.mxu0 %v338
    %466 = vmatpush1.bf16.msra.mxu0 %v337
    %467 = vmatprep.subr.bf16.mxu0 %v340
    %468 = vmatpush1.bf16.msra.mxu0 %v339
    %469 = vmatprep.subr.bf16.mxu0 %v342
    %470 = vmatpush1.bf16.msra.mxu0 %v341
    %471 = vmatprep.subr.bf16.mxu0 %v344
    %472 = vmatpush1.bf16.msra.mxu0 %v343
    %473 = vmatprep.subr.bf16.mxu0 %v346
    %474 = vmatpush1.bf16.msra.mxu0 %v345
    %475 = vmatprep.subr.bf16.mxu0 %v348
    %476 = vmatpush1.bf16.msra.mxu0 %v347
    %477 = vmatprep.mubr.bf16.mxu0 %v110
    %478 = vmatmul.mubr.bf16.gmra.mrb[0].mxu0 %v109
    %v479 = vpop.f32.mrb[0].mxu0
    %v480 = vadd.f32 %v118, %v479
    %v481 = vpop.f32.mrb[0].mxu0
    %v482 = vadd.f32 %v122, %v481
    %v483 = vpop.f32.mrb[0].mxu0
    %v484 = vpop.f32.mrb[0].mxu0
    %485 = vdwg.mxu0
    %486 = vmatprep.subr.bf16.mxu0 %v350
    %487 = vmatpush1.bf16.msra.mxu0 %v349
    %488 = vmatprep.subr.bf16.mxu0 %v352
    %489 = vmatpush1.bf16.msra.mxu0 %v351
    %490 = vmatprep.subr.bf16.mxu0 %v354
    %491 = vmatpush1.bf16.msra.mxu0 %v353
    %492 = vmatprep.subr.bf16.mxu0 %v356
    %493 = vmatpush1.bf16.msra.mxu0 %v355
    %494 = vmatprep.subr.bf16.mxu0 %v358
    %495 = vmatpush1.bf16.msra.mxu0 %v357
    %496 = vmatprep.subr.bf16.mxu0 %v360
    %497 = vmatpush1.bf16.msra.mxu0 %v359
    %498 = vmatprep.subr.bf16.mxu0 %v362
    %499 = vmatpush1.bf16.msra.mxu0 %v361
    %500 = vmatprep.subr.bf16.mxu0 %v364
    %501 = vmatpush1.bf16.msra.mxu0 %v363
    %502 = vmatprep.subr.bf16.mxu0 %v366
    %503 = vmatpush1.bf16.msra.mxu0 %v365
    %504 = vmatprep.subr.bf16.mxu0 %v368
    %505 = vmatpush1.bf16.msra.mxu0 %v367
    %506 = vmatprep.subr.bf16.mxu0 %v370
    %507 = vmatpush1.bf16.msra.mxu0 %v369
    %508 = vmatprep.subr.bf16.mxu0 %v372
    %509 = vmatpush1.bf16.msra.mxu0 %v371
    %510 = vmatprep.subr.bf16.mxu0 %v374
    %511 = vmatpush1.bf16.msra.mxu0 %v373
    %512 = vmatprep.subr.bf16.mxu0 %v376
    %513 = vmatpush1.bf16.msra.mxu0 %v375
    %514 = vmatprep.subr.bf16.mxu0 %v378
    %515 = vmatpush1.bf16.msra.mxu0 %v377
    %516 = vmatprep.subr.bf16.mxu0 %v380
    %517 = vmatpush1.bf16.msra.mxu0 %v379
    %518 = vmatprep.mubr.bf16.mxu0 %v112
    %519 = vmatmul.mubr.bf16.gmra.mrb[0].mxu0 %v111
    %v520 = vpop.f32.mrb[0].mxu0
    %v521 = vadd.f32 %v480, %v520
    %v522 = vpop.f32.mrb[0].mxu0
    %v523 = vadd.f32 %v482, %v522
    %v524 = vpop.f32.mrb[0].mxu0
    %v525 = vpop.f32.mrb[0].mxu0
    %526 = vdwg.mxu0
    %527 = vst [vmem:[#allocation7] sm:$0xff] %v521
    %528 = vst [vmem:[#allocation7 + $0x8] sm:$0xff] %v523
    // Predicated region
    $region22: #{tpu_custom_call.1} parent=1 // pred_check
      _
    $region23: #{tpu_custom_call.1} parent=1 // pred_check_branch
      %530 = sbr.rel (0) target = $region25
    $region24: #{tpu_custom_call.1} parent=1 // pred_region
      %s532 = ssub.s32 256, 256
      %533 = vsyncadd [#allocation4], %s532
      %s535 = sshll.u32 [#allocation7], 4
      %s536 = int_to_ptr.vmem [resolvable:$true] %s535
      %538 = dma.vmem_to_hbm [thread:$0]  %s536, 256, %s3, [#allocation4]
    $region25: #{tpu_custom_call.1} parent=1 // pred_fallthru
      _
    // Predicated region
    $region26: #{tpu_custom_call.1} parent=1 // pred_check
      _
    $region27: #{tpu_custom_call.1} parent=1 // pred_check_branch
      %540 = sbr.rel (0) target = $region29
    $region28: #{tpu_custom_call.1} parent=1 // pred_region
      %541 = dma.done [#allocation4], 256
    $region29: #{tpu_custom_call.1} parent=1 // pred_fallthru
      _
    %542 = vsyncpa [#allocation3], 1
    %543 = vsyncpa [#allocation6], 1
    %544 = vsyncpa [#allocation4], 1

</llo_original>
